<compile_context>
chip_gen: v7x
topology: tpu7x:2x2x1
jax: 0.10.0
libtpu: 0.0.40
codegen_flags: <defaults>
</compile_context>

<pallas_src>
import functools

import jax
import jax.numpy as jnp
from jax.experimental import pallas as pl
from jax.experimental.pallas import tpu as pltpu


def _ce_kernel(x_ref, t_ref, out_ref, *, eps: float, num_classes: int,
               n_rows: int, tile_n: int):
    """Per-tile smoothed cross-entropy row losses.

    x_ref:   (tile_n, C)  logits (any float dtype; upcast to f32 here)
    t_ref:   (tile_n, 1)  int32 target class indices
    out_ref: (tile_n, 1)  f32 per-row loss (0 for padded rows)
    """
    x = x_ref[...].astype(jnp.float32)            # (tile_n, C)
    t = t_ref[...]                                # (tile_n, 1) int32
    tn, c = x.shape

    # Numerically-stable log-softmax pieces (keep the max subtraction!).
    m = jnp.max(x, axis=1, keepdims=True)                          # (tile_n, 1)
    shifted = x - m                                                # (tile_n, C)
    lse = jnp.log(jnp.sum(jnp.exp(shifted), axis=1, keepdims=True))  # (tile_n, 1)

    # Target (shifted) logit via a single masked sum -- no one-hot / smoothed
    # (tile_n, C) temporaries are materialized.
    cls_ids = jax.lax.broadcasted_iota(jnp.int32, (tn, c), 1)
    shifted_t = jnp.sum(jnp.where(cls_ids == t, shifted, 0.0),
                        axis=1, keepdims=True)                     # (tile_n, 1)
    sum_shifted = jnp.sum(shifted, axis=1, keepdims=True)          # (tile_n, 1)

    # Closed-form smoothed CE:
    #   -(1-eps)*log_p[t] - (eps/C)*sum_c log_p[c]
    # = (1-eps)*(lse - shifted_t) - (eps/C)*(sum_shifted - C*lse)
    per_row = ((1.0 - eps) * (lse - shifted_t)
               - (eps / num_classes) * (sum_shifted - num_classes * lse))

    # Mask rows that only exist as padding of the last partial tile.
    row_ids = (pl.program_id(0) * tile_n
               + jax.lax.broadcasted_iota(jnp.int32, (tn, 1), 0))
    out_ref[...] = jnp.where(row_ids < n_rows, per_row, 0.0)


def cross_entropy_loss(inputs, targets, *, num_classes: int, eps: float = 0.1,
                       max_tile_rows: int = 1024):
    """Pallas TPU implementation of label-smoothed cross-entropy.

    inputs:  (N, C) float logits (f32 or bf16 -- kept in HBM dtype)
    targets: (N,)   int class indices
    returns: scalar float32 loss  ==  (-smoothed_onehot * log_softmax).mean(0).sum()
    """
    n, c = inputs.shape
    assert c == num_classes
    targets_2d = targets.astype(jnp.int32).reshape(n, 1)

    # Tile sizing: target ~4 MiB of logits per tile so the double-buffered
    # pipeline stays well inside v7x's VMEM (and the 32 MiB scoped default).
    itemsize = jnp.dtype(inputs.dtype).itemsize
    budget_rows = max(8, (4 * 1024 * 1024) // max(1, c * itemsize))
    tile_n = min(int(max_tile_rows), int(budget_rows))
    tile_n = max(8, (tile_n // 8) * 8)          # sublane-aligned
    if n <= tile_n:
        tile_n = n                              # block == full array: always legal
    num_tiles = pl.cdiv(n, tile_n)

    kernel = functools.partial(
        _ce_kernel, eps=float(eps), num_classes=int(num_classes),
        n_rows=int(n), tile_n=int(tile_n))

    per_row = pl.pallas_call(
        kernel,
        grid=(num_tiles,),
        out_shape=jax.ShapeDtypeStruct((num_tiles * tile_n, 1), jnp.float32),
        in_specs=[
            pl.BlockSpec((tile_n, c), lambda i: (i, 0)),   # logits tile
            pl.BlockSpec((tile_n, 1), lambda i: (i, 0)),   # targets tile
        ],
        out_specs=pl.BlockSpec((tile_n, 1), lambda i: (i, 0)),
        compiler_params=pltpu.CompilerParams(
            dimension_semantics=("parallel",),             # shard tiles across TCs
            vmem_limit_bytes=32 * 1024 * 1024,
        ),
    )(inputs, targets_2d)

    # Tiny final reduction (sum of per-row losses, padded rows are 0) / N in XLA.
    return jnp.sum(per_row) / n


def _reference(inputs, targets, *, num_classes: int, eps: float = 0.1):
    log_probs = jax.nn.log_softmax(inputs.astype(jnp.float32), axis=1)
    onehot = jax.nn.one_hot(targets, num_classes, dtype=jnp.float32)
    smoothed = (1.0 - eps) * onehot + eps / num_classes
    return jnp.sum(jnp.mean(-smoothed * log_probs, axis=0))


if __name__ == "__main__":
    key = jax.random.PRNGKey(0)
    k1, k2, k3, k4 = jax.random.split(key, 4)

    eps = 0.1

    # Case 1: small, single tile (batch=8, classes=32).
    batch, num_classes = 8, 32
    inputs = jax.random.normal(k1, (batch, num_classes), dtype=jnp.float32)
    targets = jax.random.randint(k2, (batch,), 0, num_classes, dtype=jnp.int32)
    loss = cross_entropy_loss(inputs, targets, num_classes=num_classes, eps=eps)
    loss = jax.block_until_ready(loss)
    ref = _reference(inputs, targets, num_classes=num_classes, eps=eps)
    assert jnp.allclose(loss, ref, rtol=1e-5, atol=1e-5), (loss, ref)

    # Case 2: multi-tile with a padded last tile (batch=40, forced TILE_N=16)
    # to exercise the grid pipeline + row masking path.
    batch2, num_classes2 = 40, 32
    inputs2 = jax.random.normal(k3, (batch2, num_classes2), dtype=jnp.float32)
    targets2 = jax.random.randint(k4, (batch2,), 0, num_classes2, dtype=jnp.int32)
    loss2 = cross_entropy_loss(inputs2, targets2, num_classes=num_classes2,
                               eps=eps, max_tile_rows=16)
    loss2 = jax.block_until_ready(loss2)
    ref2 = _reference(inputs2, targets2, num_classes=num_classes2, eps=eps)
    assert jnp.allclose(loss2, ref2, rtol=1e-5, atol=1e-5), (loss2, ref2)

    print("KERNEL_OK")
</pallas_src>

<mosaic_0001>
module attributes {stable_mosaic.version = 11 : i64} {
  func.func @_ce_kernel(%arg0: i32, %arg1: memref<8x32xf32, #tpu.memory_space<vmem>>, %arg2: memref<8x1xi32, #tpu.memory_space<vmem>>, %arg3: memref<8x1xf32, #tpu.memory_space<vmem>>) attributes {dimension_semantics = [#tpu.dimension_semantics<parallel>], iteration_bounds = array<i64: 1>, scalar_prefetch = 0 : i64, scratch_operands = 0 : i64, tpu.core_type = #tpu.core_type<tc>, window_params = [{transform_indices = @transform_0, window_bounds = array<i64: 8, 32>}, {transform_indices = @transform_1, window_bounds = array<i64: 8, 1>}, {transform_indices = @transform_2, window_bounds = array<i64: 8, 1>}]} {
    %c0 = arith.constant 0 : index
    %c0_0 = arith.constant 0 : index
    %0 = vector.load %arg1[%c0, %c0_0] : memref<8x32xf32, #tpu.memory_space<vmem>>, vector<8x32xf32>
    %c0_1 = arith.constant 0 : index
    %c0_2 = arith.constant 0 : index
    %1 = vector.load %arg2[%c0_1, %c0_2] : memref<8x1xi32, #tpu.memory_space<vmem>>, vector<8x1xi32>
    %cst = arith.constant dense<0xFF800000> : vector<8xf32>
    %2 = vector.multi_reduction <maximumf>, %0, %cst [1] : vector<8x32xf32> to vector<8xf32>
    %3 = vector.shape_cast %2 : vector<8xf32> to vector<8x1xf32>
    %4 = vector.broadcast %3 : vector<8x1xf32> to vector<8x32xf32>
    %5 = arith.subf %0, %4 : vector<8x32xf32>
    %6 = math.exp %5 : vector<8x32xf32>
    %cst_3 = arith.constant dense<0.000000e+00> : vector<8xf32>
    %7 = vector.multi_reduction <add>, %6, %cst_3 [1] : vector<8x32xf32> to vector<8xf32>
    %8 = vector.shape_cast %7 : vector<8xf32> to vector<8x1xf32>
    %9 = math.log %8 : vector<8x1xf32>
    %10 = tpu.iota {dimensions = array<i32: 1>} : vector<8x32xi32>
    %11 = vector.broadcast %1 : vector<8x1xi32> to vector<8x32xi32>
    %12 = arith.cmpi eq, %10, %11 : vector<8x32xi32>
    %cst_4 = arith.constant 0.000000e+00 : f32
    %13 = vector.broadcast %cst_4 : f32 to vector<8x32xf32>
    %14 = arith.select %12, %5, %13 : vector<8x32xi1>, vector<8x32xf32>
    %cst_5 = arith.constant dense<0.000000e+00> : vector<8xf32>
    %15 = vector.multi_reduction <add>, %14, %cst_5 [1] : vector<8x32xf32> to vector<8xf32>
    %16 = vector.shape_cast %15 : vector<8xf32> to vector<8x1xf32>
    %cst_6 = arith.constant dense<0.000000e+00> : vector<8xf32>
    %17 = vector.multi_reduction <add>, %5, %cst_6 [1] : vector<8x32xf32> to vector<8xf32>
    %18 = vector.shape_cast %17 : vector<8xf32> to vector<8x1xf32>
    %19 = arith.subf %9, %16 : vector<8x1xf32>
    %cst_7 = arith.constant 0.899999976 : f32
    %20 = vector.broadcast %cst_7 : f32 to vector<8x1xf32>
    %21 = arith.mulf %20, %19 : vector<8x1xf32>
    %cst_8 = arith.constant 3.200000e+01 : f32
    %22 = vector.broadcast %cst_8 : f32 to vector<8x1xf32>
    %23 = arith.mulf %22, %9 : vector<8x1xf32>
    %24 = arith.subf %18, %23 : vector<8x1xf32>
    %cst_9 = arith.constant 3.125000e-03 : f32
    %25 = vector.broadcast %cst_9 : f32 to vector<8x1xf32>
    %26 = arith.mulf %25, %24 : vector<8x1xf32>
    %27 = arith.subf %21, %26 : vector<8x1xf32>
    %c8_i32 = arith.constant 8 : i32
    %28 = arith.muli %arg0, %c8_i32 : i32
    %29 = tpu.iota {dimensions = array<i32: 0>} : vector<8x1xi32>
    %30 = vector.broadcast %28 : i32 to vector<8x1xi32>
    %31 = arith.addi %30, %29 : vector<8x1xi32>
    %c8_i32_10 = arith.constant 8 : i32
    %32 = vector.broadcast %c8_i32_10 : i32 to vector<8x1xi32>
    %33 = arith.cmpi slt, %31, %32 : vector<8x1xi32>
    %cst_11 = arith.constant 0.000000e+00 : f32
    %34 = vector.broadcast %cst_11 : f32 to vector<8x1xf32>
    %35 = arith.select %33, %27, %34 : vector<8x1xi1>, vector<8x1xf32>
    %c0_12 = arith.constant 0 : index
    %c0_13 = arith.constant 0 : index
    %36 = vector.load %arg3[%c0_12, %c0_13] : memref<8x1xf32, #tpu.memory_space<vmem>>, vector<8x1xf32>
    tpu.vector_store %arg3[%c0_12, %c0_13], %35 {strides = array<i32>} : memref<8x1xf32, #tpu.memory_space<vmem>>, vector<8x1xf32>,
    return
  }
  func.func @transform_0(%arg0: i32) -> (i32, i32) {
    %c0_i32 = arith.constant 0 : i32
    %c0_i32_0 = arith.constant 0 : i32
    return %arg0, %c0_i32 : i32, i32
  }
  func.func @transform_1(%arg0: i32) -> (i32, i32) {
    %c0_i32 = arith.constant 0 : i32
    %c0_i32_0 = arith.constant 0 : i32
    return %arg0, %c0_i32 : i32, i32
  }
  func.func @transform_2(%arg0: i32) -> (i32, i32) {
    %c0_i32 = arith.constant 0 : i32
    %c0_i32_0 = arith.constant 0 : i32
    return %arg0, %c0_i32 : i32, i32
  }
}

</mosaic_0001>

<llo_original>
// kernel: tpu_custom_call.1
$region0: #{tpu_custom_call.1}
  #allocation0 [shape = 'u32[]', space=smem, size = 0x4, offset = 0x4, fixed_abs, tag = 'smem constant byte address 0x4 - core index']
  #allocation1 [shape = 'u32[144,128]{1,0:T(1,128)}', space=vmem, size = 0x12000, scoped, tag = 'internal scratch']
  %s0 = inlined_call_operand.vmem [shape: f32[8,32], index: 0, kind: input, shape index: {}]
  %s1 = inlined_call_operand.vmem [shape: s32[8,1], index: 1, kind: input, shape index: {}]
  %s2 = inlined_call_operand.vmem [shape: f32[8,1], index: 2, kind: output, shape index: {}]
  %s3 = sld [smem:[#allocation0]]
  $region18: #{tpu_custom_call.1} parent=0
    _
  %s5 = ssub.s32 1, %s3
  %s6 = scalar_select 0, %s5, %s3
  // Predicated region
  $region2: #{tpu_custom_call.1} parent=0 // pred_check
    _
  $region3: #{tpu_custom_call.1} parent=0 // pred_check_branch
    %8 = sbr.rel (0) target = $region5
  $region4: #{tpu_custom_call.1} parent=0 // pred_region
    _
  $region5: #{tpu_custom_call.1} parent=0 // pred_fallthru
    _
  // Predicated region
  $region6: #{tpu_custom_call.1} parent=0 // pred_check
    _
  $region7: #{tpu_custom_call.1} parent=0 // pred_check_branch
    %10 = sbr.rel (0) target = $region9
  $region8: #{tpu_custom_call.1} parent=0 // pred_region
    _
  $region9: #{tpu_custom_call.1} parent=0 // pred_fallthru
    _
  %v11 = vld [vmem:[%s0] sm:$0xff]
  %v12 = vld [vmem:[%s1] sm:$0xff]
  %vm13 = vcmask 261120
  %v14 = vsel %vm13, %v11, -inf
  %15 = vmax.xlane.f32.xlu0 %v14
  %v16 = vpop.xlane.xlu0 %15
  %v17 = vsub.f32 %v11, %v16
  %v18 = vmul.f32 %v17, 1.442695
  %v19 = vpow.pop %v18
  %v20 = vsel %vm13, %v19, 0.0
  %21 = vadd.xlane.f32.xlu0 %v20
  %v22 = vpop.xlane.xlu0 %21
  %v23 = vlog2.pop %v22
  %v24 = vmul.f32 %v23, 0.6931472
  %v25 = vlaneseq
  %v26 = vand.u32 %v25, 127
  %27 = vset.pattern.permute.xlu0 0
  %28 = vperm.xlu0 %27, %v12
  %v29 = vpop.permute.xlu0 %28
  %vm30 = vcmp.eq.s32.totalorder %v26, %v29
  %v31 = vsel %vm30, %v17, 0.0
  %v32 = vsel %vm13, %v31, 0.0
  %33 = vadd.xlane.f32.xlu0 %v32
  %v34 = vpop.xlane.xlu0 %33
  %v35 = vsel %vm13, %v17, 0.0
  %36 = vadd.xlane.f32.xlu0 %v35
  %v37 = vpop.xlane.xlu0 %36
  %v38 = vsub.f32 %v24, %v34
  %v39 = vmul.f32 %v38, 0.9
  %v40 = vmul.f32 %v24, 32.0
  %v41 = vsub.f32 %v37, %v40
  %v42 = vmul.f32 %v41, 0.003125
  %v43 = vsub.f32 %v39, %v42
  %s44 = smul.u32 0, 8
  %v45 = vlaneseq
  %v46 = vshrl.u32 %v45, 7
  %v47 = vstv %s44
  %v48 = vadd.s32 %v47, %v46
  %vm49 = vcmp.lt.s32.totalorder %v48, 8
  %v50 = vsel %vm49, %v43, 0.0
  %vm51 = vcmask 7168
  %52 = vst.msk [vmem:[%s2] sm:$0xff] %vm51, %v50
  // Predicated region
  $region10: #{tpu_custom_call.1} parent=0 // pred_check
    _
  $region11: #{tpu_custom_call.1} parent=0 // pred_check_branch
    %54 = sbr.rel (0) target = $region13
  $region12: #{tpu_custom_call.1} parent=0 // pred_region
    _
  $region13: #{tpu_custom_call.1} parent=0 // pred_fallthru
    _
  // Predicated region
  $region14: #{tpu_custom_call.1} parent=0 // pred_check
    _
  $region15: #{tpu_custom_call.1} parent=0 // pred_check_branch
    %56 = sbr.rel (0) target = $region17
  $region16: #{tpu_custom_call.1} parent=0 // pred_region
    _
  $region17: #{tpu_custom_call.1} parent=0 // pred_fallthru
    _

</llo_original>
